<compile_context>
chip_gen: v5e
topology: v5e:2x2
jax: 0.10.0
libtpu: 0.0.40
codegen_flags: <defaults>
</compile_context>

<pallas_src>
import functools

import jax
import jax.numpy as jnp
from jax.experimental import pallas as pl
from jax.experimental.pallas import tpu as pltpu


def _round_up(n, m):
    return ((n + m - 1) // m) * m


def _vampnet_kernel(x_ref,
                    w0_ref, b0_ref,
                    w1_ref, b1_ref,
                    w2_ref, b2_ref,
                    w3_ref, b3_ref,
                    w4_ref, b4_ref,
                    o_ref):
    """Whole MLP for one batch tile. All weights are resident in VMEM.

    x arrives as f32 and is cast to the weights' dtype (bf16) in-kernel;
    biases are f32; activations accumulate in f32 and are re-cast to bf16
    only right before each matmul. Output is stored in f32.
    """
    x = x_ref[...].astype(w0_ref.dtype)  # f32 -> bf16 cast inside the kernel

    # Input Linear: [tb, state_dim] @ [state_dim, nf] + [1, nf]  (f32 accum)
    h = jnp.dot(x, w0_ref[...], preferred_element_type=jnp.float32) + b0_ref[...]

    # Three residual blocks: h = h + relu(h @ W + b), elementwise in f32.
    for w_ref, b_ref in ((w1_ref, b1_ref), (w2_ref, b2_ref), (w3_ref, b3_ref)):
        z = jnp.dot(h.astype(w_ref.dtype), w_ref[...],
                    preferred_element_type=jnp.float32) + b_ref[...]
        h = h + jnp.maximum(z, 0.0)

    # Output Linear: [tb, nf] @ [nf, outdim] + [1, outdim], stored in f32.
    out = jnp.dot(h.astype(w4_ref.dtype), w4_ref[...],
                  preferred_element_type=jnp.float32) + b4_ref[...]
    o_ref[...] = out.astype(o_ref.dtype)


def vampnet_forward(x, params, *, block_b=2048, min_grid_steps=1,
                    compute_dtype=jnp.bfloat16):
    """x: [B, state_dim] float32. params: list of (W[in,out], b[1,out]) f32.

    Returns [B, outdim] float32. Weights are stored as [in, out] (PyTorch W.T)
    so x @ W + b matches PyTorch's x @ W.T + b exactly.

    min_grid_steps: set to 2 on v7x so the batch grid can shard across both
    TensorCores; leave at 1 on single-TC chips (v5e/v6e).
    """
    B, state_dim = x.shape
    nf = params[0][0].shape[1]
    outdim = params[-1][0].shape[1]

    # --- tile selection -----------------------------------------------------
    # x and out tiles are f32 -> sublane granularity 8 rows.
    sub = 8
    n_steps = max(pl.cdiv(B, block_b), min_grid_steps)
    tb = _round_up(max(pl.cdiv(B, n_steps), sub), sub)
    tb = min(tb, _round_up(max(B, sub), sub))
    B_pad = _round_up(B, tb)
    grid_b = B_pad // tb

    # --- prepare operands ----------------------------------------------------
    # x stays f32 (cast happens in-kernel); pad batch only if needed.
    x_p = x
    if B_pad != B:
        x_p = jnp.pad(x_p, ((0, B_pad - B), (0, 0)))

    # Weights cast once (tiny, effectively one-time); biases stay f32.
    flat = []
    for (w, b) in params:
        flat.extend([w.astype(compute_dtype), b.astype(jnp.float32)])

    # --- specs ----------------------------------------------------------------
    def full_spec(arr):
        # Small, grid-invariant parameter: one full-array block, reused by
        # every batch tile (constant block index -> no re-DMA per step).
        return pl.BlockSpec(arr.shape, lambda i: (0, 0))

    in_specs = [pl.BlockSpec((tb, state_dim), lambda i: (i, 0))]
    in_specs += [full_spec(a) for a in flat]
    # Output block's last dim equals the full array dim (outdim) -> legal and
    # byte-minimal; no column padding, no post-kernel column slice.
    out_spec = pl.BlockSpec((tb, outdim), lambda i: (i, 0))

    # --- cost estimate for the XLA scheduler (real, unpadded sizes) ----------
    flops = 2 * B_pad * (state_dim * nf + 3 * nf * nf + nf * outdim)
    param_bytes = sum(a.size * a.dtype.itemsize for a in flat)
    bytes_accessed = (x_p.size * x_p.dtype.itemsize
                      + param_bytes
                      + B_pad * outdim * 4)
    cost = pl.CostEstimate(flops=flops, transcendentals=0,
                           bytes_accessed=bytes_accessed)

    out_padded = pl.pallas_call(
        _vampnet_kernel,
        out_shape=jax.ShapeDtypeStruct((B_pad, outdim), jnp.float32),
        grid_spec=pl.GridSpec(
            grid=(grid_b,),
            in_specs=in_specs,
            out_specs=out_spec,
        ),
        compiler_params=pltpu.CompilerParams(
            dimension_semantics=("parallel",)),
        cost_estimate=cost,
    )(x_p, *flat)

    # Strip batch padding (no-op slice when B_pad == B).
    return out_padded if B_pad == B else out_padded[:B]


def init_params(key, state_dim, nf, outdim):
    """Deterministic synthetic parameter init (PyTorch Linear shapes, stored
    transposed as [in, out])."""
    dims = [(state_dim, nf), (nf, nf), (nf, nf), (nf, nf), (nf, outdim)]
    params = []
    for (din, dout) in dims:
        key, kw, kb = jax.random.split(key, 3)
        scale = 1.0 / jnp.sqrt(jnp.float32(din))
        w = jax.random.uniform(kw, (din, dout), jnp.float32, -scale, scale)
        b = jax.random.uniform(kb, (1, dout), jnp.float32, -scale, scale)
        params.append((w, b))
    return params


def vampnet_reference(x, params, compute_dtype=jnp.bfloat16):
    """Pure-JAX reference using the same precision recipe as the kernel
    (bf16 matmul inputs, f32 accumulation and elementwise)."""
    (w0, b0), (w1, b1), (w2, b2), (w3, b3), (w4, b4) = params
    cd = compute_dtype
    h = jnp.dot(x.astype(cd), w0.astype(cd),
                preferred_element_type=jnp.float32) + b0
    for w, b in ((w1, b1), (w2, b2), (w3, b3)):
        z = jnp.dot(h.astype(cd), w.astype(cd),
                    preferred_element_type=jnp.float32) + b
        h = h + jnp.maximum(z, 0.0)
    return jnp.dot(h.astype(cd), w4.astype(cd),
                   preferred_element_type=jnp.float32) + b4


if __name__ == "__main__":
    # Small config consistent with the module (x_only state input).
    B, state_dim, nf, outdim = 64, 16, 32, 8

    key = jax.random.PRNGKey(0)
    key, kx = jax.random.split(key)
    x = jax.random.normal(kx, (B, state_dim), jnp.float32)
    params = init_params(key, state_dim, nf, outdim)

    run = jax.jit(functools.partial(vampnet_forward, block_b=2048))
    out = jax.block_until_ready(run(x, params))
    assert out.shape == (B, outdim)

    # Exact-recipe reference (same bf16-in / f32-accum math): tight tolerance.
    ref = vampnet_reference(x, params, compute_dtype=jnp.bfloat16)
    assert jnp.allclose(out, ref, atol=2e-3, rtol=2e-3), "mismatch vs bf16 reference"

    # Sanity check vs full-f32 math: loose tolerance (bf16 rounding).
    ref_f32 = vampnet_reference(x, params, compute_dtype=jnp.float32)
    assert jnp.allclose(out, ref_f32, atol=5e-2, rtol=5e-2), "mismatch vs f32 reference"

    print("KERNEL_OK")
</pallas_src>

<mosaic_0001>
module attributes {stable_mosaic.version = 11 : i64} {
  func.func @_vampnet_kernel(%arg0: i32, %arg1: memref<64x16xf32, #tpu.memory_space<vmem>>, %arg2: memref<16x32xbf16, #tpu.memory_space<vmem>>, %arg3: memref<1x32xf32, #tpu.memory_space<vmem>>, %arg4: memref<32x32xbf16, #tpu.memory_space<vmem>>, %arg5: memref<1x32xf32, #tpu.memory_space<vmem>>, %arg6: memref<32x32xbf16, #tpu.memory_space<vmem>>, %arg7: memref<1x32xf32, #tpu.memory_space<vmem>>, %arg8: memref<32x32xbf16, #tpu.memory_space<vmem>>, %arg9: memref<1x32xf32, #tpu.memory_space<vmem>>, %arg10: memref<32x8xbf16, #tpu.memory_space<vmem>>, %arg11: memref<1x8xf32, #tpu.memory_space<vmem>>, %arg12: memref<64x8xf32, #tpu.memory_space<vmem>>) attributes {dimension_semantics = [#tpu.dimension_semantics<parallel>], iteration_bounds = array<i64: 1>, scalar_prefetch = 0 : i64, scratch_operands = 0 : i64, tpu.core_type = #tpu.core_type<tc>, window_params = [{transform_indices = @transform_0, window_bounds = array<i64: 64, 16>}, {pipeline_mode = #tpu.pipeline_mode<synchronous>, transform_indices = @transform_1, window_bounds = array<i64: 16, 32>}, {pipeline_mode = #tpu.pipeline_mode<synchronous>, transform_indices = @transform_2, window_bounds = array<i64: 1, 32>}, {pipeline_mode = #tpu.pipeline_mode<synchronous>, transform_indices = @transform_3, window_bounds = array<i64: 32, 32>}, {pipeline_mode = #tpu.pipeline_mode<synchronous>, transform_indices = @transform_4, window_bounds = array<i64: 1, 32>}, {pipeline_mode = #tpu.pipeline_mode<synchronous>, transform_indices = @transform_5, window_bounds = array<i64: 32, 32>}, {pipeline_mode = #tpu.pipeline_mode<synchronous>, transform_indices = @transform_6, window_bounds = array<i64: 1, 32>}, {pipeline_mode = #tpu.pipeline_mode<synchronous>, transform_indices = @transform_7, window_bounds = array<i64: 32, 32>}, {pipeline_mode = #tpu.pipeline_mode<synchronous>, transform_indices = @transform_8, window_bounds = array<i64: 1, 32>}, {pipeline_mode = #tpu.pipeline_mode<synchronous>, transform_indices = @transform_9, window_bounds = array<i64: 32, 8>}, {pipeline_mode = #tpu.pipeline_mode<synchronous>, transform_indices = @transform_10, window_bounds = array<i64: 1, 8>}, {transform_indices = @transform_11, window_bounds = array<i64: 64, 8>}]} {
    %c0 = arith.constant 0 : index
    %c0_0 = arith.constant 0 : index
    %0 = vector.load %arg1[%c0, %c0_0] : memref<64x16xf32, #tpu.memory_space<vmem>>, vector<64x16xf32>
    %1 = arith.truncf %0 : vector<64x16xf32> to vector<64x16xbf16>
    %c0_1 = arith.constant 0 : index
    %c0_2 = arith.constant 0 : index
    %2 = vector.load %arg2[%c0_1, %c0_2] : memref<16x32xbf16, #tpu.memory_space<vmem>>, vector<16x32xbf16>
    %cst = arith.constant dense<0.000000e+00> : vector<64x32xf32>
    %3 = tpu.matmul %1, %2, %cst {dimension_numbers = #tpu.dot_dimension_numbers<[1], [0], [0], [1], [0, 0, 1, 1], [], []>} : vector<64x16xbf16>, vector<16x32xbf16>, vector<64x32xf32> -> vector<64x32xf32>
    %c0_3 = arith.constant 0 : index
    %c0_4 = arith.constant 0 : index
    %4 = vector.load %arg3[%c0_3, %c0_4] : memref<1x32xf32, #tpu.memory_space<vmem>>, vector<1x32xf32>
    %5 = vector.broadcast %4 : vector<1x32xf32> to vector<64x32xf32>
    %6 = arith.addf %3, %5 : vector<64x32xf32>
    %7 = arith.truncf %6 : vector<64x32xf32> to vector<64x32xbf16>
    %c0_5 = arith.constant 0 : index
    %c0_6 = arith.constant 0 : index
    %8 = vector.load %arg4[%c0_5, %c0_6] : memref<32x32xbf16, #tpu.memory_space<vmem>>, vector<32x32xbf16>
    %cst_7 = arith.constant dense<0.000000e+00> : vector<64x32xf32>
    %9 = tpu.matmul %7, %8, %cst_7 {dimension_numbers = #tpu.dot_dimension_numbers<[1], [0], [0], [1], [0, 0, 1, 1], [], []>} : vector<64x32xbf16>, vector<32x32xbf16>, vector<64x32xf32> -> vector<64x32xf32>
    %c0_8 = arith.constant 0 : index
    %c0_9 = arith.constant 0 : index
    %10 = vector.load %arg5[%c0_8, %c0_9] : memref<1x32xf32, #tpu.memory_space<vmem>>, vector<1x32xf32>
    %11 = vector.broadcast %10 : vector<1x32xf32> to vector<64x32xf32>
    %12 = arith.addf %9, %11 : vector<64x32xf32>
    %cst_10 = arith.constant 0.000000e+00 : f32
    %13 = vector.broadcast %cst_10 : f32 to vector<64x32xf32>
    %14 = arith.maximumf %12, %13 : vector<64x32xf32>
    %15 = arith.addf %6, %14 : vector<64x32xf32>
    %16 = arith.truncf %15 : vector<64x32xf32> to vector<64x32xbf16>
    %c0_11 = arith.constant 0 : index
    %c0_12 = arith.constant 0 : index
    %17 = vector.load %arg6[%c0_11, %c0_12] : memref<32x32xbf16, #tpu.memory_space<vmem>>, vector<32x32xbf16>
    %cst_13 = arith.constant dense<0.000000e+00> : vector<64x32xf32>
    %18 = tpu.matmul %16, %17, %cst_13 {dimension_numbers = #tpu.dot_dimension_numbers<[1], [0], [0], [1], [0, 0, 1, 1], [], []>} : vector<64x32xbf16>, vector<32x32xbf16>, vector<64x32xf32> -> vector<64x32xf32>
    %c0_14 = arith.constant 0 : index
    %c0_15 = arith.constant 0 : index
    %19 = vector.load %arg7[%c0_14, %c0_15] : memref<1x32xf32, #tpu.memory_space<vmem>>, vector<1x32xf32>
    %20 = vector.broadcast %19 : vector<1x32xf32> to vector<64x32xf32>
    %21 = arith.addf %18, %20 : vector<64x32xf32>
    %cst_16 = arith.constant 0.000000e+00 : f32
    %22 = vector.broadcast %cst_16 : f32 to vector<64x32xf32>
    %23 = arith.maximumf %21, %22 : vector<64x32xf32>
    %24 = arith.addf %15, %23 : vector<64x32xf32>
    %25 = arith.truncf %24 : vector<64x32xf32> to vector<64x32xbf16>
    %c0_17 = arith.constant 0 : index
    %c0_18 = arith.constant 0 : index
    %26 = vector.load %arg8[%c0_17, %c0_18] : memref<32x32xbf16, #tpu.memory_space<vmem>>, vector<32x32xbf16>
    %cst_19 = arith.constant dense<0.000000e+00> : vector<64x32xf32>
    %27 = tpu.matmul %25, %26, %cst_19 {dimension_numbers = #tpu.dot_dimension_numbers<[1], [0], [0], [1], [0, 0, 1, 1], [], []>} : vector<64x32xbf16>, vector<32x32xbf16>, vector<64x32xf32> -> vector<64x32xf32>
    %c0_20 = arith.constant 0 : index
    %c0_21 = arith.constant 0 : index
    %28 = vector.load %arg9[%c0_20, %c0_21] : memref<1x32xf32, #tpu.memory_space<vmem>>, vector<1x32xf32>
    %29 = vector.broadcast %28 : vector<1x32xf32> to vector<64x32xf32>
    %30 = arith.addf %27, %29 : vector<64x32xf32>
    %cst_22 = arith.constant 0.000000e+00 : f32
    %31 = vector.broadcast %cst_22 : f32 to vector<64x32xf32>
    %32 = arith.maximumf %30, %31 : vector<64x32xf32>
    %33 = arith.addf %24, %32 : vector<64x32xf32>
    %34 = arith.truncf %33 : vector<64x32xf32> to vector<64x32xbf16>
    %c0_23 = arith.constant 0 : index
    %c0_24 = arith.constant 0 : index
    %35 = vector.load %arg10[%c0_23, %c0_24] : memref<32x8xbf16, #tpu.memory_space<vmem>>, vector<32x8xbf16>
    %cst_25 = arith.constant dense<0.000000e+00> : vector<64x8xf32>
    %36 = tpu.matmul %34, %35, %cst_25 {dimension_numbers = #tpu.dot_dimension_numbers<[1], [0], [0], [1], [0, 0, 1, 1], [], []>} : vector<64x32xbf16>, vector<32x8xbf16>, vector<64x8xf32> -> vector<64x8xf32>
    %c0_26 = arith.constant 0 : index
    %c0_27 = arith.constant 0 : index
    %37 = vector.load %arg11[%c0_26, %c0_27] : memref<1x8xf32, #tpu.memory_space<vmem>>, vector<1x8xf32>
    %38 = vector.broadcast %37 : vector<1x8xf32> to vector<64x8xf32>
    %39 = arith.addf %36, %38 : vector<64x8xf32>
    %c0_28 = arith.constant 0 : index
    %c0_29 = arith.constant 0 : index
    %40 = vector.load %arg12[%c0_28, %c0_29] : memref<64x8xf32, #tpu.memory_space<vmem>>, vector<64x8xf32>
    tpu.vector_store %arg12[%c0_28, %c0_29], %39 {strides = array<i32>} : memref<64x8xf32, #tpu.memory_space<vmem>>, vector<64x8xf32>,
    return
  }
  func.func @transform_0(%arg0: i32) -> (i32, i32) {
    %c0_i32 = arith.constant 0 : i32
    %c0_i32_0 = arith.constant 0 : i32
    return %arg0, %c0_i32 : i32, i32
  }
  func.func @transform_1(%arg0: i32) -> (i32, i32) {
    %c0_i32 = arith.constant 0 : i32
    %c0_i32_0 = arith.constant 0 : i32
    %c0_i32_1 = arith.constant 0 : i32
    return %c0_i32, %c0_i32_0 : i32, i32
  }
  func.func @transform_2(%arg0: i32) -> (i32, i32) {
    %c0_i32 = arith.constant 0 : i32
    %c0_i32_0 = arith.constant 0 : i32
    %c0_i32_1 = arith.constant 0 : i32
    return %c0_i32, %c0_i32_0 : i32, i32
  }
  func.func @transform_3(%arg0: i32) -> (i32, i32) {
    %c0_i32 = arith.constant 0 : i32
    %c0_i32_0 = arith.constant 0 : i32
    %c0_i32_1 = arith.constant 0 : i32
    return %c0_i32, %c0_i32_0 : i32, i32
  }
  func.func @transform_4(%arg0: i32) -> (i32, i32) {
    %c0_i32 = arith.constant 0 : i32
    %c0_i32_0 = arith.constant 0 : i32
    %c0_i32_1 = arith.constant 0 : i32
    return %c0_i32, %c0_i32_0 : i32, i32
  }
  func.func @transform_5(%arg0: i32) -> (i32, i32) {
    %c0_i32 = arith.constant 0 : i32
    %c0_i32_0 = arith.constant 0 : i32
    %c0_i32_1 = arith.constant 0 : i32
    return %c0_i32, %c0_i32_0 : i32, i32
  }
  func.func @transform_6(%arg0: i32) -> (i32, i32) {
    %c0_i32 = arith.constant 0 : i32
    %c0_i32_0 = arith.constant 0 : i32
    %c0_i32_1 = arith.constant 0 : i32
    return %c0_i32, %c0_i32_0 : i32, i32
  }
  func.func @transform_7(%arg0: i32) -> (i32, i32) {
    %c0_i32 = arith.constant 0 : i32
    %c0_i32_0 = arith.constant 0 : i32
    %c0_i32_1 = arith.constant 0 : i32
    return %c0_i32, %c0_i32_0 : i32, i32
  }
  func.func @transform_8(%arg0: i32) -> (i32, i32) {
    %c0_i32 = arith.constant 0 : i32
    %c0_i32_0 = arith.constant 0 : i32
    %c0_i32_1 = arith.constant 0 : i32
    return %c0_i32, %c0_i32_0 : i32, i32
  }
  func.func @transform_9(%arg0: i32) -> (i32, i32) {
    %c0_i32 = arith.constant 0 : i32
    %c0_i32_0 = arith.constant 0 : i32
    %c0_i32_1 = arith.constant 0 : i32
    return %c0_i32, %c0_i32_0 : i32, i32
  }
  func.func @transform_10(%arg0: i32) -> (i32, i32) {
    %c0_i32 = arith.constant 0 : i32
    %c0_i32_0 = arith.constant 0 : i32
    %c0_i32_1 = arith.constant 0 : i32
    return %c0_i32, %c0_i32_0 : i32, i32
  }
  func.func @transform_11(%arg0: i32) -> (i32, i32) {
    %c0_i32 = arith.constant 0 : i32
    %c0_i32_0 = arith.constant 0 : i32
    return %arg0, %c0_i32 : i32, i32
  }
}

</mosaic_0001>

<llo_original>
// kernel: vampnet_forward.1
$region0: #{vampnet_forward.1}
  #allocation0 [shape = 'u32[]', space=smem, size = 0x4, offset = 0x4, fixed_abs, tag = 'smem constant byte address 0x4 - core index']
  #allocation1 [shape = 'u32[72,128]{1,0:T(1,128)}', space=vmem, size = 0x9000, scoped, tag = 'internal scratch']
  %s0 = inlined_call_operand.vmem [shape: f32[64,16], index: 0, kind: input, shape index: {}]
  %s1 = inlined_call_operand.vmem [shape: bf16[16,32], index: 1, kind: input, shape index: {}]
  %s2 = inlined_call_operand.vmem [shape: f32[1,32], index: 2, kind: input, shape index: {}]
  %s3 = inlined_call_operand.vmem [shape: bf16[32,32], index: 3, kind: input, shape index: {}]
  %s4 = inlined_call_operand.vmem [shape: f32[1,32], index: 4, kind: input, shape index: {}]
  %s5 = inlined_call_operand.vmem [shape: bf16[32,32], index: 5, kind: input, shape index: {}]
  %s6 = inlined_call_operand.vmem [shape: f32[1,32], index: 6, kind: input, shape index: {}]
  %s7 = inlined_call_operand.vmem [shape: bf16[32,32], index: 7, kind: input, shape index: {}]
  %s8 = inlined_call_operand.vmem [shape: f32[1,32], index: 8, kind: input, shape index: {}]
  %s9 = inlined_call_operand.vmem [shape: bf16[32,8], index: 9, kind: input, shape index: {}]
  %s10 = inlined_call_operand.vmem [shape: f32[1,8], index: 10, kind: input, shape index: {}]
  %s11 = inlined_call_operand.vmem [shape: f32[64,8], index: 11, kind: output, shape index: {}]
  %s12 = sld [smem:[#allocation0]]
  $region54: #{vampnet_forward.1} parent=0
    _
  %s14 = ssub.s32 1, %s12
  %s15 = scalar_select 0, %s14, %s12
  // Predicated region
  $region2: #{vampnet_forward.1} parent=0 // pred_check
    _
  $region3: #{vampnet_forward.1} parent=0 // pred_check_branch
    %17 = sbr.rel (0) target = $region5
  $region4: #{vampnet_forward.1} parent=0 // pred_region
    _
  $region5: #{vampnet_forward.1} parent=0 // pred_fallthru
    _
  // Predicated region
  $region6: #{vampnet_forward.1} parent=0 // pred_check
    _
  $region7: #{vampnet_forward.1} parent=0 // pred_check_branch
    %19 = sbr.rel (0) target = $region9
  $region8: #{vampnet_forward.1} parent=0 // pred_region
    _
  $region9: #{vampnet_forward.1} parent=0 // pred_fallthru
    _
  // Predicated region
  $region10: #{vampnet_forward.1} parent=0 // pred_check
    _
  $region11: #{vampnet_forward.1} parent=0 // pred_check_branch
    %21 = sbr.rel (0) target = $region13
  $region12: #{vampnet_forward.1} parent=0 // pred_region
    _
  $region13: #{vampnet_forward.1} parent=0 // pred_fallthru
    _
  // Predicated region
  $region14: #{vampnet_forward.1} parent=0 // pred_check
    _
  $region15: #{vampnet_forward.1} parent=0 // pred_check_branch
    %23 = sbr.rel (0) target = $region17
  $region16: #{vampnet_forward.1} parent=0 // pred_region
    _
  $region17: #{vampnet_forward.1} parent=0 // pred_fallthru
    _
  // Predicated region
  $region18: #{vampnet_forward.1} parent=0 // pred_check
    _
  $region19: #{vampnet_forward.1} parent=0 // pred_check_branch
    %25 = sbr.rel (0) target = $region21
  $region20: #{vampnet_forward.1} parent=0 // pred_region
    _
  $region21: #{vampnet_forward.1} parent=0 // pred_fallthru
    _
  // Predicated region
  $region22: #{vampnet_forward.1} parent=0 // pred_check
    _
  $region23: #{vampnet_forward.1} parent=0 // pred_check_branch
    %27 = sbr.rel (0) target = $region25
  $region24: #{vampnet_forward.1} parent=0 // pred_region
    _
  $region25: #{vampnet_forward.1} parent=0 // pred_fallthru
    _
  // Predicated region
  $region26: #{vampnet_forward.1} parent=0 // pred_check
    _
  $region27: #{vampnet_forward.1} parent=0 // pred_check_branch
    %29 = sbr.rel (0) target = $region29
  $region28: #{vampnet_forward.1} parent=0 // pred_region
    _
  $region29: #{vampnet_forward.1} parent=0 // pred_fallthru
    _
  // Predicated region
  $region30: #{vampnet_forward.1} parent=0 // pred_check
    _
  $region31: #{vampnet_forward.1} parent=0 // pred_check_branch
    %31 = sbr.rel (0) target = $region33
  $region32: #{vampnet_forward.1} parent=0 // pred_region
    _
  $region33: #{vampnet_forward.1} parent=0 // pred_fallthru
    _
  // Predicated region
  $region34: #{vampnet_forward.1} parent=0 // pred_check
    _
  $region35: #{vampnet_forward.1} parent=0 // pred_check_branch
    %33 = sbr.rel (0) target = $region37
  $region36: #{vampnet_forward.1} parent=0 // pred_region
    _
  $region37: #{vampnet_forward.1} parent=0 // pred_fallthru
    _
  // Predicated region
  $region38: #{vampnet_forward.1} parent=0 // pred_check
    _
  $region39: #{vampnet_forward.1} parent=0 // pred_check_branch
    %35 = sbr.rel (0) target = $region41
  $region40: #{vampnet_forward.1} parent=0 // pred_region
    _
  $region41: #{vampnet_forward.1} parent=0 // pred_fallthru
    _
  // Predicated region
  $region42: #{vampnet_forward.1} parent=0 // pred_check
    _
  $region43: #{vampnet_forward.1} parent=0 // pred_check_branch
    %37 = sbr.rel (0) target = $region45
  $region44: #{vampnet_forward.1} parent=0 // pred_region
    _
  $region45: #{vampnet_forward.1} parent=0 // pred_fallthru
    _
  %v39 = vld [vmem:[%s0] sm:$0xff]
  %v40 = vld [vmem:[%s0 + $0x8] sm:$0xff]
  %v41 = vld [vmem:[%s0 + $0x10] sm:$0xff]
  %v42 = vld [vmem:[%s0 + $0x18] sm:$0xff]
  %v43 = vld [vmem:[%s0 + $0x20] sm:$0xff]
  %v44 = vld [vmem:[%s0 + $0x28] sm:$0xff]
  %v45 = vld [vmem:[%s0 + $0x30] sm:$0xff]
  %v46 = vld [vmem:[%s0 + $0x38] sm:$0xff]
  %v47 = vpack.c.bf16 %v40, %v39
  %v48 = vpack.c.bf16 %v42, %v41
  %v49 = vpack.c.bf16 %v44, %v43
  %v50 = vpack.c.bf16 %v46, %v45
  %v51 = vld [vmem:[%s1] sm:$0xf]
  %v52 = vld [vmem:[%s1 + $0x4] sm:$0xf]
  %v53 = vld [vmem:[%s2] sm:$0x1]
  %v55 = vperm.slane %v53, 0
  %v59 = vunpack.c.l.b16 %v51
  %v60 = vunpack.c.l.b16 %v52
  %v61 = vpack.c.b16 %v60, %v59
  %vm63 = vcmask 130048
  %v65 = vsel %vm63, %v47, 0
  %v68 = vsel %vm63, %v48, 0
  %v71 = vsel %vm63, %v49, 0
  %v74 = vsel %vm63, %v50, 0
  %76 = vmatpush.bf16.msra.mxu0 0
  %77 = vmatpush.bf16.msra.mxu0 0
  %78 = vmatpush.bf16.msra.mxu0 0
  %79 = vmatpush.bf16.msra.mxu0 0
  %80 = vmatpush.bf16.msra.mxu0 0
  %81 = vmatpush.bf16.msra.mxu0 0
  %82 = vmatpush.bf16.msra.mxu0 0
  %83 = vmatpush.bf16.msra.mxu0 %v61
  %84 = vmatmul.bf16.gmra.mxu0 %v65
  %v85 = vpop.f32.mrf.mxu0
  %v86 = vadd.f32 %v55, %v85
  %v87 = vpop.f32.mrf.mxu0
  %v88 = vadd.f32 %v55, %v87
  %89 = vmatmul.bf16.gmra.mxu0 %v68
  %v90 = vpop.f32.mrf.mxu0
  %v91 = vadd.f32 %v55, %v90
  %v92 = vpop.f32.mrf.mxu0
  %v93 = vadd.f32 %v55, %v92
  %94 = vmatmul.bf16.gmra.mxu0 %v71
  %v95 = vpop.f32.mrf.mxu0
  %v96 = vadd.f32 %v55, %v95
  %v97 = vpop.f32.mrf.mxu0
  %v98 = vadd.f32 %v55, %v97
  %99 = vmatmul.bf16.gmra.mxu0 %v74
  %v100 = vpop.f32.mrf.mxu0
  %v101 = vadd.f32 %v55, %v100
  %v102 = vpop.f32.mrf.mxu0
  %v103 = vadd.f32 %v55, %v102
  %104 = vdwg.mxu0
  %v105 = vpack.c.bf16 %v88, %v86
  %v106 = vpack.c.bf16 %v93, %v91
  %v107 = vpack.c.bf16 %v98, %v96
  %v108 = vpack.c.bf16 %v103, %v101
  %v109 = vld [vmem:[%s3] sm:$0xf]
  %v110 = vld [vmem:[%s3 + $0x4] sm:$0xf]
  %v111 = vld [vmem:[%s3 + $0x8] sm:$0xf]
  %v112 = vld [vmem:[%s3 + $0xc] sm:$0xf]
  %v113 = vld [vmem:[%s4] sm:$0x1]
  %v115 = vperm.slane %v113, 0
  %v121 = vunpack.c.l.b16 %v109
  %v122 = vunpack.c.l.b16 %v110
  %v123 = vunpack.c.l.b16 %v111
  %v124 = vunpack.c.l.b16 %v112
  %v125 = vpack.c.b16 %v122, %v121
  %v126 = vpack.c.b16 %v124, %v123
  %vm129 = vcmask 261120
  %v131 = vsel %vm129, %v105, 0
  %v134 = vsel %vm129, %v106, 0
  %v137 = vsel %vm129, %v107, 0
  %v140 = vsel %vm129, %v108, 0
  %142 = vmatpush.bf16.msra.mxu0 0
  %143 = vmatpush.bf16.msra.mxu0 0
  %144 = vmatpush.bf16.msra.mxu0 0
  %145 = vmatpush.bf16.msra.mxu0 0
  %146 = vmatpush.bf16.msra.mxu0 0
  %147 = vmatpush.bf16.msra.mxu0 0
  %148 = vmatpush.bf16.msra.mxu0 %v126
  %149 = vmatpush.bf16.msra.mxu0 %v125
  %150 = vmatmul.bf16.gmra.mxu0 %v131
  %v151 = vpop.f32.mrf.mxu0
  %v152 = vadd.f32 %v115, %v151
  %v153 = vpop.f32.mrf.mxu0
  %v154 = vadd.f32 %v115, %v153
  %155 = vmatmul.bf16.gmra.mxu0 %v134
  %v156 = vpop.f32.mrf.mxu0
  %v157 = vadd.f32 %v115, %v156
  %v158 = vpop.f32.mrf.mxu0
  %v159 = vadd.f32 %v115, %v158
  %160 = vmatmul.bf16.gmra.mxu0 %v137
  %v161 = vpop.f32.mrf.mxu0
  %v162 = vadd.f32 %v115, %v161
  %v163 = vpop.f32.mrf.mxu0
  %v164 = vadd.f32 %v115, %v163
  %165 = vmatmul.bf16.gmra.mxu0 %v140
  %v166 = vpop.f32.mrf.mxu0
  %v167 = vadd.f32 %v115, %v166
  %v168 = vpop.f32.mrf.mxu0
  %v169 = vadd.f32 %v115, %v168
  %170 = vdwg.mxu0
  %v171 = vmax.f32 %v152, 0.0
  %v172 = vmax.f32 %v154, 0.0
  %v173 = vmax.f32 %v157, 0.0
  %v174 = vmax.f32 %v159, 0.0
  %v175 = vmax.f32 %v162, 0.0
  %v176 = vmax.f32 %v164, 0.0
  %v177 = vmax.f32 %v167, 0.0
  %v178 = vmax.f32 %v169, 0.0
  %v179 = vadd.f32 %v86, %v171
  %v180 = vadd.f32 %v88, %v172
  %v181 = vadd.f32 %v91, %v173
  %v182 = vadd.f32 %v93, %v174
  %v183 = vadd.f32 %v96, %v175
  %v184 = vadd.f32 %v98, %v176
  %v185 = vadd.f32 %v101, %v177
  %v186 = vadd.f32 %v103, %v178
  %v187 = vpack.c.bf16 %v180, %v179
  %v188 = vpack.c.bf16 %v182, %v181
  %v189 = vpack.c.bf16 %v184, %v183
  %v190 = vpack.c.bf16 %v186, %v185
  %v191 = vld [vmem:[%s5] sm:$0xf]
  %v192 = vld [vmem:[%s5 + $0x4] sm:$0xf]
  %v193 = vld [vmem:[%s5 + $0x8] sm:$0xf]
  %v194 = vld [vmem:[%s5 + $0xc] sm:$0xf]
  %v195 = vld [vmem:[%s6] sm:$0x1]
  %v197 = vperm.slane %v195, 0
  %v203 = vunpack.c.l.b16 %v191
  %v204 = vunpack.c.l.b16 %v192
  %v205 = vunpack.c.l.b16 %v193
  %v206 = vunpack.c.l.b16 %v194
  %v207 = vpack.c.b16 %v204, %v203
  %v208 = vpack.c.b16 %v206, %v205
  %v212 = vsel %vm129, %v187, 0
  %v215 = vsel %vm129, %v188, 0
  %v218 = vsel %vm129, %v189, 0
  %v221 = vsel %vm129, %v190, 0
  %223 = vmatpush.bf16.msra.mxu0 0
  %224 = vmatpush.bf16.msra.mxu0 0
  %225 = vmatpush.bf16.msra.mxu0 0
  %226 = vmatpush.bf16.msra.mxu0 0
  %227 = vmatpush.bf16.msra.mxu0 0
  %228 = vmatpush.bf16.msra.mxu0 0
  %229 = vmatpush.bf16.msra.mxu0 %v208
  %230 = vmatpush.bf16.msra.mxu0 %v207
  %231 = vmatmul.bf16.gmra.mxu0 %v212
  %v232 = vpop.f32.mrf.mxu0
  %v233 = vadd.f32 %v197, %v232
  %v234 = vpop.f32.mrf.mxu0
  %v235 = vadd.f32 %v197, %v234
  %236 = vmatmul.bf16.gmra.mxu0 %v215
  %v237 = vpop.f32.mrf.mxu0
  %v238 = vadd.f32 %v197, %v237
  %v239 = vpop.f32.mrf.mxu0
  %v240 = vadd.f32 %v197, %v239
  %241 = vmatmul.bf16.gmra.mxu0 %v218
  %v242 = vpop.f32.mrf.mxu0
  %v243 = vadd.f32 %v197, %v242
  %v244 = vpop.f32.mrf.mxu0
  %v245 = vadd.f32 %v197, %v244
  %246 = vmatmul.bf16.gmra.mxu0 %v221
  %v247 = vpop.f32.mrf.mxu0
  %v248 = vadd.f32 %v197, %v247
  %v249 = vpop.f32.mrf.mxu0
  %v250 = vadd.f32 %v197, %v249
  %251 = vdwg.mxu0
  %v252 = vmax.f32 %v233, 0.0
  %v253 = vmax.f32 %v235, 0.0
  %v254 = vmax.f32 %v238, 0.0
  %v255 = vmax.f32 %v240, 0.0
  %v256 = vmax.f32 %v243, 0.0
  %v257 = vmax.f32 %v245, 0.0
  %v258 = vmax.f32 %v248, 0.0
  %v259 = vmax.f32 %v250, 0.0
  %v260 = vadd.f32 %v179, %v252
  %v261 = vadd.f32 %v180, %v253
  %v262 = vadd.f32 %v181, %v254
  %v263 = vadd.f32 %v182, %v255
  %v264 = vadd.f32 %v183, %v256
  %v265 = vadd.f32 %v184, %v257
  %v266 = vadd.f32 %v185, %v258
  %v267 = vadd.f32 %v186, %v259
  %v268 = vpack.c.bf16 %v261, %v260
  %v269 = vpack.c.bf16 %v263, %v262
  %v270 = vpack.c.bf16 %v265, %v264
  %v271 = vpack.c.bf16 %v267, %v266
  %v272 = vld [vmem:[%s7] sm:$0xf]
  %v273 = vld [vmem:[%s7 + $0x4] sm:$0xf]
  %v274 = vld [vmem:[%s7 + $0x8] sm:$0xf]
  %v275 = vld [vmem:[%s7 + $0xc] sm:$0xf]
  %v276 = vld [vmem:[%s8] sm:$0x1]
  %v278 = vperm.slane %v276, 0
  %v284 = vunpack.c.l.b16 %v272
  %v285 = vunpack.c.l.b16 %v273
  %v286 = vunpack.c.l.b16 %v274
  %v287 = vunpack.c.l.b16 %v275
  %v288 = vpack.c.b16 %v285, %v284
  %v289 = vpack.c.b16 %v287, %v286
  %v293 = vsel %vm129, %v268, 0
  %v296 = vsel %vm129, %v269, 0
  %v299 = vsel %vm129, %v270, 0
  %v302 = vsel %vm129, %v271, 0
  %304 = vmatpush.bf16.msra.mxu0 0
  %305 = vmatpush.bf16.msra.mxu0 0
  %306 = vmatpush.bf16.msra.mxu0 0
  %307 = vmatpush.bf16.msra.mxu0 0
  %308 = vmatpush.bf16.msra.mxu0 0
  %309 = vmatpush.bf16.msra.mxu0 0
  %310 = vmatpush.bf16.msra.mxu0 %v289
  %311 = vmatpush.bf16.msra.mxu0 %v288
  %312 = vmatmul.bf16.gmra.mxu0 %v293
  %v313 = vpop.f32.mrf.mxu0
  %v314 = vadd.f32 %v278, %v313
  %v315 = vpop.f32.mrf.mxu0
  %v316 = vadd.f32 %v278, %v315
  %317 = vmatmul.bf16.gmra.mxu0 %v296
  %v318 = vpop.f32.mrf.mxu0
  %v319 = vadd.f32 %v278, %v318
  %v320 = vpop.f32.mrf.mxu0
  %v321 = vadd.f32 %v278, %v320
  %322 = vmatmul.bf16.gmra.mxu0 %v299
  %v323 = vpop.f32.mrf.mxu0
  %v324 = vadd.f32 %v278, %v323
  %v325 = vpop.f32.mrf.mxu0
  %v326 = vadd.f32 %v278, %v325
  %327 = vmatmul.bf16.gmra.mxu0 %v302
  %v328 = vpop.f32.mrf.mxu0
  %v329 = vadd.f32 %v278, %v328
  %v330 = vpop.f32.mrf.mxu0
  %v331 = vadd.f32 %v278, %v330
  %332 = vdwg.mxu0
  %v333 = vmax.f32 %v314, 0.0
  %v334 = vmax.f32 %v316, 0.0
  %v335 = vmax.f32 %v319, 0.0
  %v336 = vmax.f32 %v321, 0.0
  %v337 = vmax.f32 %v324, 0.0
  %v338 = vmax.f32 %v326, 0.0
  %v339 = vmax.f32 %v329, 0.0
  %v340 = vmax.f32 %v331, 0.0
  %v341 = vadd.f32 %v260, %v333
  %v342 = vadd.f32 %v261, %v334
  %v343 = vadd.f32 %v262, %v335
  %v344 = vadd.f32 %v263, %v336
  %v345 = vadd.f32 %v264, %v337
  %v346 = vadd.f32 %v265, %v338
  %v347 = vadd.f32 %v266, %v339
  %v348 = vadd.f32 %v267, %v340
  %v349 = vpack.c.bf16 %v342, %v341
  %v350 = vpack.c.bf16 %v344, %v343
  %v351 = vpack.c.bf16 %v346, %v345
  %v352 = vpack.c.bf16 %v348, %v347
  %v353 = vld [vmem:[%s9] sm:$0xf]
  %v354 = vld [vmem:[%s9 + $0x4] sm:$0xf]
  %v355 = vld [vmem:[%s9 + $0x8] sm:$0xf]
  %v356 = vld [vmem:[%s9 + $0xc] sm:$0xf]
  %v357 = vld [vmem:[%s10] sm:$0x1]
  %v359 = vperm.slane %v357, 0
  %v365 = vunpack.c.l.b16 %v353
  %v366 = vunpack.c.l.b16 %v354
  %v367 = vunpack.c.l.b16 %v355
  %v368 = vunpack.c.l.b16 %v356
  %v369 = vpack.c.b16 %v366, %v365
  %v370 = vpack.c.b16 %v368, %v367
  %v374 = vsel %vm129, %v349, 0
  %v377 = vsel %vm129, %v350, 0
  %v380 = vsel %vm129, %v351, 0
  %v383 = vsel %vm129, %v352, 0
  %385 = vmatpush.bf16.msra.mxu0 0
  %386 = vmatpush.bf16.msra.mxu0 0
  %387 = vmatpush.bf16.msra.mxu0 0
  %388 = vmatpush.bf16.msra.mxu0 0
  %389 = vmatpush.bf16.msra.mxu0 0
  %390 = vmatpush.bf16.msra.mxu0 0
  %391 = vmatpush.bf16.msra.mxu0 %v370
  %392 = vmatpush.bf16.msra.mxu0 %v369
  %393 = vmatmul.bf16.gmra.mxu0 %v374
  %v394 = vpop.f32.mrf.mxu0
  %v395 = vadd.f32 %v359, %v394
  %v396 = vpop.f32.mrf.mxu0
  %v397 = vadd.f32 %v359, %v396
  %398 = vmatmul.bf16.gmra.mxu0 %v377
  %v399 = vpop.f32.mrf.mxu0
  %v400 = vadd.f32 %v359, %v399
  %v401 = vpop.f32.mrf.mxu0
  %v402 = vadd.f32 %v359, %v401
  %403 = vmatmul.bf16.gmra.mxu0 %v380
  %v404 = vpop.f32.mrf.mxu0
  %v405 = vadd.f32 %v359, %v404
  %v406 = vpop.f32.mrf.mxu0
  %v407 = vadd.f32 %v359, %v406
  %408 = vmatmul.bf16.gmra.mxu0 %v383
  %v409 = vpop.f32.mrf.mxu0
  %v410 = vadd.f32 %v359, %v409
  %v411 = vpop.f32.mrf.mxu0
  %v412 = vadd.f32 %v359, %v411
  %413 = vdwg.mxu0
  %vm414 = vcmask 64512
  %415 = vst.msk [vmem:[%s11] sm:$0xff] %vm414, %v395
  %416 = vst.msk [vmem:[%s11 + $0x8] sm:$0xff] %vm414, %v397
  %417 = vst.msk [vmem:[%s11 + $0x10] sm:$0xff] %vm414, %v400
  %418 = vst.msk [vmem:[%s11 + $0x18] sm:$0xff] %vm414, %v402
  %419 = vst.msk [vmem:[%s11 + $0x20] sm:$0xff] %vm414, %v405
  %420 = vst.msk [vmem:[%s11 + $0x28] sm:$0xff] %vm414, %v407
  %421 = vst.msk [vmem:[%s11 + $0x30] sm:$0xff] %vm414, %v410
  %422 = vst.msk [vmem:[%s11 + $0x38] sm:$0xff] %vm414, %v412
  // Predicated region
  $region46: #{vampnet_forward.1} parent=0 // pred_check
    _
  $region47: #{vampnet_forward.1} parent=0 // pred_check_branch
    %424 = sbr.rel (0) target = $region49
  $region48: #{vampnet_forward.1} parent=0 // pred_region
    _
  $region49: #{vampnet_forward.1} parent=0 // pred_fallthru
    _
  // Predicated region
  $region50: #{vampnet_forward.1} parent=0 // pred_check
    _
  $region51: #{vampnet_forward.1} parent=0 // pred_check_branch
    %426 = sbr.rel (0) target = $region53
  $region52: #{vampnet_forward.1} parent=0 // pred_region
    _
  $region53: #{vampnet_forward.1} parent=0 // pred_fallthru
    _

</llo_original>
